<compile_context>
chip_gen: v7x
topology: tpu7x:2x2x1
jax: 0.10.0
libtpu: 0.0.40
codegen_flags: <defaults>
</compile_context>

<pallas_src>
import jax
import jax.numpy as jnp
from jax import lax
from jax.experimental import pallas as pl
from jax.experimental.pallas import tpu as pltpu


# ----------------------------- fused conv+BN+ReLU kernel --------------------

def _make_conv_bn_relu_kernel(n_in, lane_w, R, Hp, Ho, Wo, cout, inv_count, eps):
    """Builds a kernel for `n_in` input feature slabs (concat fused via weight split).

    refs = (x_slab_0..n-1, wt_0..n-1, gamma, beta, G, Gt, out)
      x_slab_i : (N*Hp, Wo*Ci)      H-zero-padded NHWC input, flattened to 2D (resident)
      wt_i     : (3*Wo*Ci, Wo*cout) Toeplitz weights, stacked over dy (resident)
      gamma/beta : (1, cout)
      G  : (Wo*cout, cout)  column -> channel reduction matrix
      Gt : (cout, Wo*cout)  channel -> column broadcast matrix
      out: (N*Ho, Wo*cout)  resident across the whole grid (written to HBM once)
    """
    width = Wo * cout

    def kernel(*refs):
        x_refs = refs[:n_in]
        wt_refs = refs[n_in:2 * n_in]
        gamma_ref, beta_ref, g_ref, gt_ref, out_ref = refs[2 * n_in:]

        n = pl.program_id(0)          # image index
        j = pl.program_id(1)          # row-block index within the image
        in_base = n * Hp + j * R      # first padded input row needed
        out_base = n * Ho + j * R     # first output row produced

        # --- conv for this row block: 3 (per dy) matmuls per input stream ---
        acc = jnp.zeros((R, width), jnp.float32)
        for i in range(n_in):
            k = lane_w[i]                                   # = Wo * Ci
            for dy in range(3):
                rows = x_refs[i][pl.ds(in_base + dy, R), :]            # (R, k)
                wdy = wt_refs[i][dy * k:(dy + 1) * k, :]               # (k, width)
                acc = acc + jnp.dot(rows, wdy,
                                    preferred_element_type=jnp.float32)
        out_ref[pl.ds(out_base, R), :] = acc                # lane-dense store

        # --- finalize: BN (training-mode batch stats) + ReLU on the resident block ---
        is_last = jnp.logical_and(n == pl.num_programs(0) - 1,
                                  j == pl.num_programs(1) - 1)

        @pl.when(is_last)
        def _finalize():
            y = out_ref[...]                                   # (N*Ho, width), all rows written
            col_sum = jnp.sum(y, axis=0, keepdims=True)        # (1, width)
            col_sq = jnp.sum(y * y, axis=0, keepdims=True)     # (1, width)
            # per-channel reduction / broadcast via tiny matmuls (no lane<->sublane reshape)
            ch_sum = jnp.dot(col_sum, g_ref[...], preferred_element_type=jnp.float32)
            ch_sq = jnp.dot(col_sq, g_ref[...], preferred_element_type=jnp.float32)
            mean = ch_sum * inv_count
            # NOTE: E[y^2]-mean^2 is fine in f32 at these sizes; use Welford for huge M.
            var = ch_sq * inv_count - mean * mean
            scale = gamma_ref[...] * lax.rsqrt(var + eps)      # (1, cout)
            shift = beta_ref[...] - mean * scale
            scale_col = jnp.dot(scale, gt_ref[...], preferred_element_type=jnp.float32)
            shift_col = jnp.dot(shift, gt_ref[...], preferred_element_type=jnp.float32)
            out_ref[...] = jnp.maximum(y * scale_col + shift_col, 0.0)

    return kernel


def _row_block(Ho, target=8):
    """Largest divisor of Ho that is <= target (avoids hard divisibility asserts)."""
    r = min(target, Ho)
    while Ho % r:
        r -= 1
    return r


def _conv3x3_bn_relu_fused(slabs, wtoeps, gamma, beta, *, N, Ho, Wo, cout,
                           eps=1e-5, compute_dtype=jnp.float32):
    """Fused 3x3 conv (pad=1) + BatchNorm2d(training batch stats) + ReLU.

    slabs[i] : (N*(Ho+2), Wo*Ci)   H-zero-padded NHWC input flattened to 2D
    wtoeps[i]: (3*Wo*Ci, Wo*cout)  Toeplitz weights (W pad folded in), stacked over dy
    returns  : (N*Ho, Wo*cout)     NHWC output flattened to 2D (free reshape to 4D)
    """
    Hp = Ho + 2
    R = _row_block(Ho)
    J = Ho // R
    n_in = len(slabs)
    lane_w = tuple(int(s.shape[1]) for s in slabs)
    width = Wo * cout

    slabs = [s.astype(compute_dtype) for s in slabs]
    wtoeps = [w.astype(compute_dtype) for w in wtoeps]

    # column -> channel reduction and channel -> column broadcast matrices
    G = jnp.tile(jnp.eye(cout, dtype=jnp.float32), (Wo, 1))     # (Wo*cout, cout)
    Gt = jnp.transpose(G)                                       # (cout, Wo*cout)
    inv_count = 1.0 / float(N * Ho * Wo)

    kernel = _make_conv_bn_relu_kernel(n_in, lane_w, R, Hp, Ho, Wo, cout,
                                       inv_count, eps)

    def full_spec(shape):
        return pl.BlockSpec(tuple(int(d) for d in shape), lambda n, j: (0, 0))

    in_specs = ([full_spec(s.shape) for s in slabs]
                + [full_spec(w.shape) for w in wtoeps]
                + [full_spec((1, cout)), full_spec((1, cout)),
                   full_spec(G.shape), full_spec(Gt.shape)])

    return pl.pallas_call(
        kernel,
        out_shape=jax.ShapeDtypeStruct((N * Ho, width), jnp.float32),
        grid_spec=pltpu.PrefetchScalarGridSpec(
            num_scalar_prefetch=0,
            grid=(N, J),
            in_specs=in_specs,
            # output block = whole array, resident across the grid -> one HBM write
            out_specs=pl.BlockSpec((N * Ho, width), lambda n, j: (0, 0)),
        ),
        compiler_params=pltpu.CompilerParams(
            dimension_semantics=("arbitrary", "arbitrary")),
    )(*slabs, *wtoeps, gamma.reshape(1, cout).astype(jnp.float32),
      beta.reshape(1, cout).astype(jnp.float32), G, Gt)


# ----------------------------- host-side (tiny, once-per-shape) prep --------

def _toeplitz_weight(w_oihw, c_start, c_count, Wo):
    """Lower the conv's W axis (incl. its zero pad) into a dense matrix.

    Returns (3*Wo*c_count, Wo*Cout):
      wt[(dy*Wo + xin)*c_count + ci, x*Cout + co] = w[co, c_start+ci, dy, xin - x + 1]
    (zero when xin - x + 1 is outside [0,3), i.e. the W zero-pad is folded in).
    """
    cout = w_oihw.shape[0]
    k_idx = jnp.arange(3)[:, None, None]
    xin_idx = jnp.arange(Wo)[None, :, None]
    x_idx = jnp.arange(Wo)[None, None, :]
    sel = (xin_idx == x_idx + k_idx - 1).astype(jnp.float32)          # (3, Wo, Wo)
    parts = []
    for dy in range(3):
        wk = jnp.transpose(w_oihw[:, c_start:c_start + c_count, dy, :],
                           (2, 1, 0)).astype(jnp.float32)             # (3, cc, cout)
        wt_dy = jnp.einsum('kXx,kio->Xixo', sel, wk)                  # (Wo, cc, Wo, cout)
        parts.append(wt_dy.reshape(Wo * c_count, Wo * cout))
    return jnp.concatenate(parts, axis=0)


def _pad_h_to_slab(x_nhwc):
    """Zero-pad H by 1 on each side and flatten NHWC -> (N*(H+2), W*C) (free reshape)."""
    n, h, w, c = x_nhwc.shape
    xp = jnp.pad(x_nhwc, ((0, 0), (1, 1), (0, 0), (0, 0)))
    return xp.reshape(n * (h + 2), w * c)


def _interp_matrix(n_in, n_out):
    """align_corners=True bilinear interpolation matrix (n_out, n_in)."""
    pos = jnp.arange(n_out, dtype=jnp.float32) * (n_in - 1) / (n_out - 1)
    i0 = jnp.floor(pos).astype(jnp.int32)
    i1 = jnp.minimum(i0 + 1, n_in - 1)
    w1 = pos - i0.astype(jnp.float32)
    m = jnp.zeros((n_out, n_in), jnp.float32)
    m = m.at[jnp.arange(n_out), i0].add(1.0 - w1)
    m = m.at[jnp.arange(n_out), i1].add(w1)
    return m


def _upsample2x_bilinear_matrix(x_nhwc):
    """Gather-free 2x bilinear (align_corners=True) as two separable matmuls."""
    N, H, W, C = x_nhwc.shape
    Uh = _interp_matrix(H, 2 * H)
    Uw = _interp_matrix(W, 2 * W)
    y = jnp.einsum('Yh,nhwc->nYwc', Uh, x_nhwc)
    return jnp.einsum('Xw,nYwc->nYXc', Uw, y)


def _conv_params(key, cin, cout):
    """Deterministic init, same distribution family as PyTorch Conv2d default."""
    k1, k2 = jax.random.split(key)
    fan_in = cin * 9
    bound = 1.0 / float(fan_in) ** 0.5
    w = jax.random.uniform(k1, (cout, cin, 3, 3), jnp.float32, -bound, bound)
    b = jax.random.uniform(k2, (cout,), jnp.float32, -bound, bound)
    return w, b


# ----------------------------- module -----------------------------------------

class UpPallas:
    """Pallas implementation of `up` (transpose=False branch)."""

    def __init__(self, inchannel_low, inchannel_same, middlechannel, outchannel, key,
                 compute_dtype=jnp.float32):
        # compute_dtype=jnp.bfloat16 halves matmul-input DMA bytes for production
        # channel counts; kept f32 here so the 1e-3 parity check below stays tight.
        k1, k2 = jax.random.split(key)
        self.c_low, self.c_same = inchannel_low, inchannel_same
        self.c_mid, self.c_out = middlechannel, outchannel
        self.compute_dtype = compute_dtype
        self.w1, self.b1 = _conv_params(k1, inchannel_low, middlechannel)
        self.w2, self.b2 = _conv_params(k2, middlechannel + inchannel_same, outchannel)
        # Conv biases (b1/b2) are kept for API parity but are *not* used by the kernel:
        # training-mode BatchNorm immediately after makes them an exact no-op.
        self.g1 = jnp.ones((middlechannel,), jnp.float32)
        self.be1 = jnp.zeros((middlechannel,), jnp.float32)
        self.g2 = jnp.ones((outchannel,), jnp.float32)
        self.be2 = jnp.zeros((outchannel,), jnp.float32)
        self._wt_cache = {}        # Toeplitz weights are built once per output width

    def _toeplitz(self, Wo):
        if Wo not in self._wt_cache:
            wt1 = _toeplitz_weight(self.w1, 0, self.c_low, Wo)
            wt2_mid = _toeplitz_weight(self.w2, 0, self.c_mid, Wo)
            wt2_sam = _toeplitz_weight(self.w2, self.c_mid, self.c_same, Wo)
            self._wt_cache[Wo] = (wt1, wt2_mid, wt2_sam)
        return self._wt_cache[Wo]

    def __call__(self, uplayer_nchw, samlayer_nchw):
        N, _, H, W = uplayer_nchw.shape
        Ho, Wo = 2 * H, 2 * W
        wt1, wt2_mid, wt2_sam = self._toeplitz(Wo)

        # NCHW -> NHWC (API-boundary layout glue)
        up_nhwc = jnp.transpose(uplayer_nchw, (0, 2, 3, 1))
        sam_nhwc = jnp.transpose(samlayer_nchw, (0, 2, 3, 1))

        # gather-free bilinear 2x upsample
        up2 = _upsample2x_bilinear_matrix(up_nhwc)

        # stage 1: conv3x3 + BN + ReLU, single fused pallas_call
        mid2d = _conv3x3_bn_relu_fused(
            [_pad_h_to_slab(up2)], [wt1], self.g1, self.be1,
            N=N, Ho=Ho, Wo=Wo, cout=self.c_mid, compute_dtype=self.compute_dtype)

        # stage 2: concat fused as two input streams with split weights
        mid4 = mid2d.reshape(N, Ho, Wo, self.c_mid)          # free reshape
        out2d = _conv3x3_bn_relu_fused(
            [_pad_h_to_slab(mid4), _pad_h_to_slab(sam_nhwc)], [wt2_mid, wt2_sam],
            self.g2, self.be2,
            N=N, Ho=Ho, Wo=Wo, cout=self.c_out, compute_dtype=self.compute_dtype)

        out = out2d.reshape(N, Ho, Wo, self.c_out)           # free reshape
        return jnp.transpose(out, (0, 3, 1, 2))              # back to NCHW


# ----------------------------- pure-JAX reference ------------------------------

def _upsample2x_bilinear_gather_ref(x_nhwc):
    N, H, W, C = x_nhwc.shape
    Ho, Wo = 2 * H, 2 * W
    ys = jnp.arange(Ho, dtype=jnp.float32) * (H - 1) / (Ho - 1)
    xs = jnp.arange(Wo, dtype=jnp.float32) * (W - 1) / (Wo - 1)
    y0 = jnp.floor(ys).astype(jnp.int32)
    x0 = jnp.floor(xs).astype(jnp.int32)
    y1 = jnp.minimum(y0 + 1, H - 1)
    x1 = jnp.minimum(x0 + 1, W - 1)
    wy = (ys - y0.astype(jnp.float32))[None, :, None, None]
    wx = (xs - x0.astype(jnp.float32))[None, None, :, None]
    top, bot = x_nhwc[:, y0, :, :], x_nhwc[:, y1, :, :]
    tl, tr = top[:, :, x0, :], top[:, :, x1, :]
    bl, br = bot[:, :, x0, :], bot[:, :, x1, :]
    return (tl * (1 - wy) * (1 - wx) + tr * (1 - wy) * wx
            + bl * wy * (1 - wx) + br * wy * wx)


def _reference(model, uplayer, samlayer, eps=1e-5):
    def conv_bn_relu(x, w, b, g, be):
        y = lax.conv_general_dilated(
            x, w, (1, 1), ((1, 1), (1, 1)),
            dimension_numbers=("NCHW", "OIHW", "NCHW"))
        y = y + b[None, :, None, None]
        m = jnp.mean(y, axis=(0, 2, 3))
        v = jnp.var(y, axis=(0, 2, 3))
        yn = (y - m[None, :, None, None]) / jnp.sqrt(v + eps)[None, :, None, None]
        return jnp.maximum(yn * g[None, :, None, None] + be[None, :, None, None], 0.0)

    up2 = jnp.transpose(
        _upsample2x_bilinear_gather_ref(jnp.transpose(uplayer, (0, 2, 3, 1))),
        (0, 3, 1, 2))
    mid = conv_bn_relu(up2, model.w1, model.b1, model.g1, model.be1)
    cat = jnp.concatenate([mid, samlayer], axis=1)
    return conv_bn_relu(cat, model.w2, model.b2, model.g2, model.be2)


# ----------------------------- main ---------------------------------------------

if __name__ == "__main__":
    key = jax.random.PRNGKey(0)
    k_up, k_sam, k_par = jax.random.split(key, 3)

    N, c_low, c_same, c_mid, c_out = 2, 4, 4, 8, 8
    H = W = 8                       # low-res input; upsampled to 16x16 (Wo*Cout = 128)

    uplayer = jax.random.normal(k_up, (N, c_low, H, W), jnp.float32)
    samlayer = jax.random.normal(k_sam, (N, c_same, 2 * H, 2 * W), jnp.float32)

    model = UpPallas(c_low, c_same, c_mid, c_out, k_par)

    out = jax.block_until_ready(model(uplayer, samlayer))
    assert out.shape == (N, c_out, 2 * H, 2 * W), out.shape

    ref = jax.block_until_ready(_reference(model, uplayer, samlayer))
    max_err = float(jnp.max(jnp.abs(out - ref)))
    assert max_err < 1e-3, f"mismatch vs reference: {max_err}"

    print("KERNEL_OK")
</pallas_src>

<mosaic_0001>
module attributes {stable_mosaic.version = 11 : i64} {
  func.func @kernel(%arg0: i32, %arg1: i32, %arg2: memref<36x64xf32, #tpu.memory_space<vmem>>, %arg3: memref<192x128xf32, #tpu.memory_space<vmem>>, %arg4: memref<1x8xf32, #tpu.memory_space<vmem>>, %arg5: memref<1x8xf32, #tpu.memory_space<vmem>>, %arg6: memref<128x8xf32, #tpu.memory_space<vmem>>, %arg7: memref<8x128xf32, #tpu.memory_space<vmem>>, %arg8: memref<32x128xf32, #tpu.memory_space<vmem>>) attributes {dimension_semantics = [#tpu.dimension_semantics<arbitrary>, #tpu.dimension_semantics<arbitrary>], iteration_bounds = array<i64: 2, 2>, scalar_prefetch = 0 : i64, scratch_operands = 0 : i64, tpu.core_type = #tpu.core_type<tc>, window_params = [{pipeline_mode = #tpu.pipeline_mode<synchronous>, transform_indices = @transform_0, window_bounds = array<i64: 36, 64>}, {pipeline_mode = #tpu.pipeline_mode<synchronous>, transform_indices = @transform_1, window_bounds = array<i64: 192, 128>}, {pipeline_mode = #tpu.pipeline_mode<synchronous>, transform_indices = @transform_2, window_bounds = array<i64: 1, 8>}, {pipeline_mode = #tpu.pipeline_mode<synchronous>, transform_indices = @transform_3, window_bounds = array<i64: 1, 8>}, {pipeline_mode = #tpu.pipeline_mode<synchronous>, transform_indices = @transform_4, window_bounds = array<i64: 128, 8>}, {pipeline_mode = #tpu.pipeline_mode<synchronous>, transform_indices = @transform_5, window_bounds = array<i64: 8, 128>}, {pipeline_mode = #tpu.pipeline_mode<synchronous>, transform_indices = @transform_6, window_bounds = array<i64: 32, 128>}]} {
    %c18_i32 = arith.constant 18 : i32
    %0 = arith.muli %arg0, %c18_i32 : i32
    %c8_i32 = arith.constant 8 : i32
    %1 = arith.muli %arg1, %c8_i32 : i32
    %2 = arith.addi %0, %1 : i32
    %c16_i32 = arith.constant 16 : i32
    %3 = arith.muli %arg0, %c16_i32 : i32
    %c8_i32_0 = arith.constant 8 : i32
    %4 = arith.muli %arg1, %c8_i32_0 : i32
    %5 = arith.addi %3, %4 : i32
    %cst = arith.constant 0.000000e+00 : f32
    %6 = vector.broadcast %cst : f32 to vector<8x128xf32>
    %c0_i32 = arith.constant 0 : i32
    %7 = arith.addi %2, %c0_i32 : i32
    %8 = arith.index_cast %7 : i32 to index
    %c0 = arith.constant 0 : index
    %9 = vector.load %arg2[%8, %c0] : memref<36x64xf32, #tpu.memory_space<vmem>>, vector<8x64xf32>
    %c0_1 = arith.constant 0 : index
    %c0_2 = arith.constant 0 : index
    %10 = vector.load %arg3[%c0_1, %c0_2] : memref<192x128xf32, #tpu.memory_space<vmem>>, vector<64x128xf32>
    %cst_3 = arith.constant dense<0.000000e+00> : vector<8x128xf32>
    %11 = tpu.matmul %9, %10, %cst_3 {dimension_numbers = #tpu.dot_dimension_numbers<[1], [0], [0], [1], [0, 0, 1, 1], [], []>} : vector<8x64xf32>, vector<64x128xf32>, vector<8x128xf32> -> vector<8x128xf32>
    %12 = arith.addf %6, %11 : vector<8x128xf32>
    %c1_i32 = arith.constant 1 : i32
    %13 = arith.addi %2, %c1_i32 : i32
    %14 = arith.index_cast %13 : i32 to index
    %c0_4 = arith.constant 0 : index
    %15 = vector.load %arg2[%14, %c0_4] : memref<36x64xf32, #tpu.memory_space<vmem>>, vector<8x64xf32>
    %c64 = arith.constant 64 : index
    %c0_5 = arith.constant 0 : index
    %16 = vector.load %arg3[%c64, %c0_5] : memref<192x128xf32, #tpu.memory_space<vmem>>, vector<64x128xf32>
    %cst_6 = arith.constant dense<0.000000e+00> : vector<8x128xf32>
    %17 = tpu.matmul %15, %16, %cst_6 {dimension_numbers = #tpu.dot_dimension_numbers<[1], [0], [0], [1], [0, 0, 1, 1], [], []>} : vector<8x64xf32>, vector<64x128xf32>, vector<8x128xf32> -> vector<8x128xf32>
    %18 = arith.addf %12, %17 : vector<8x128xf32>
    %c2_i32 = arith.constant 2 : i32
    %19 = arith.addi %2, %c2_i32 : i32
    %20 = arith.index_cast %19 : i32 to index
    %c0_7 = arith.constant 0 : index
    %21 = vector.load %arg2[%20, %c0_7] : memref<36x64xf32, #tpu.memory_space<vmem>>, vector<8x64xf32>
    %c128 = arith.constant 128 : index
    %c0_8 = arith.constant 0 : index
    %22 = vector.load %arg3[%c128, %c0_8] : memref<192x128xf32, #tpu.memory_space<vmem>>, vector<64x128xf32>
    %cst_9 = arith.constant dense<0.000000e+00> : vector<8x128xf32>
    %23 = tpu.matmul %21, %22, %cst_9 {dimension_numbers = #tpu.dot_dimension_numbers<[1], [0], [0], [1], [0, 0, 1, 1], [], []>} : vector<8x64xf32>, vector<64x128xf32>, vector<8x128xf32> -> vector<8x128xf32>
    %24 = arith.addf %18, %23 : vector<8x128xf32>
    %25 = arith.index_cast %5 : i32 to index
    %c0_10 = arith.constant 0 : index
    %26 = vector.load %arg8[%25, %c0_10] : memref<32x128xf32, #tpu.memory_space<vmem>>, vector<8x128xf32>
    tpu.vector_store %arg8[%25, %c0_10], %24 {strides = array<i32>} : memref<32x128xf32, #tpu.memory_space<vmem>>, vector<8x128xf32>,
    %c1_i32_11 = arith.constant 1 : i32
    %27 = arith.cmpi eq, %arg0, %c1_i32_11 : i32
    %c1_i32_12 = arith.constant 1 : i32
    %28 = arith.cmpi eq, %arg1, %c1_i32_12 : i32
    %29 = arith.andi %27, %28 : i1
    %30 = arith.extui %29 : i1 to i32
    %c0_i32_13 = arith.constant 0 : i32
    %31 = arith.cmpi ne, %30, %c0_i32_13 : i32
    scf.if %31 {
      %c0_14 = arith.constant 0 : index
      %c0_15 = arith.constant 0 : index
      %32 = vector.load %arg8[%c0_14, %c0_15] : memref<32x128xf32, #tpu.memory_space<vmem>>, vector<32x128xf32>
      %cst_16 = arith.constant dense<0.000000e+00> : vector<128xf32>
      %33 = vector.multi_reduction <add>, %32, %cst_16 [0] : vector<32x128xf32> to vector<128xf32>
      %34 = vector.shape_cast %33 : vector<128xf32> to vector<1x128xf32>
      %35 = arith.mulf %32, %32 : vector<32x128xf32>
      %cst_17 = arith.constant dense<0.000000e+00> : vector<128xf32>
      %36 = vector.multi_reduction <add>, %35, %cst_17 [0] : vector<32x128xf32> to vector<128xf32>
      %37 = vector.shape_cast %36 : vector<128xf32> to vector<1x128xf32>
      %c0_18 = arith.constant 0 : index
      %c0_19 = arith.constant 0 : index
      %38 = vector.load %arg6[%c0_18, %c0_19] : memref<128x8xf32, #tpu.memory_space<vmem>>, vector<128x8xf32>
      %cst_20 = arith.constant dense<0.000000e+00> : vector<1x8xf32>
      %39 = tpu.matmul %34, %38, %cst_20 {dimension_numbers = #tpu.dot_dimension_numbers<[1], [0], [0], [1], [0, 0, 1, 1], [], []>} : vector<1x128xf32>, vector<128x8xf32>, vector<1x8xf32> -> vector<1x8xf32>
      %c0_21 = arith.constant 0 : index
      %c0_22 = arith.constant 0 : index
      %40 = vector.load %arg6[%c0_21, %c0_22] : memref<128x8xf32, #tpu.memory_space<vmem>>, vector<128x8xf32>
      %cst_23 = arith.constant dense<0.000000e+00> : vector<1x8xf32>
      %41 = tpu.matmul %37, %40, %cst_23 {dimension_numbers = #tpu.dot_dimension_numbers<[1], [0], [0], [1], [0, 0, 1, 1], [], []>} : vector<1x128xf32>, vector<128x8xf32>, vector<1x8xf32> -> vector<1x8xf32>
      %cst_24 = arith.constant 0.001953125 : f32
      %42 = vector.broadcast %cst_24 : f32 to vector<1x8xf32>
      %43 = arith.mulf %39, %42 : vector<1x8xf32>
      %cst_25 = arith.constant 0.001953125 : f32
      %44 = vector.broadcast %cst_25 : f32 to vector<1x8xf32>
      %45 = arith.mulf %41, %44 : vector<1x8xf32>
      %46 = arith.mulf %43, %43 : vector<1x8xf32>
      %47 = arith.subf %45, %46 : vector<1x8xf32>
      %c0_26 = arith.constant 0 : index
      %c0_27 = arith.constant 0 : index
      %48 = vector.load %arg4[%c0_26, %c0_27] : memref<1x8xf32, #tpu.memory_space<vmem>>, vector<1x8xf32>
      %cst_28 = arith.constant 9.99999974E-6 : f32
      %49 = vector.broadcast %cst_28 : f32 to vector<1x8xf32>
      %50 = arith.addf %47, %49 : vector<1x8xf32>
      %51 = math.rsqrt %50 : vector<1x8xf32>
      %52 = arith.mulf %48, %51 : vector<1x8xf32>
      %c0_29 = arith.constant 0 : index
      %c0_30 = arith.constant 0 : index
      %53 = vector.load %arg5[%c0_29, %c0_30] : memref<1x8xf32, #tpu.memory_space<vmem>>, vector<1x8xf32>
      %54 = arith.mulf %43, %52 : vector<1x8xf32>
      %55 = arith.subf %53, %54 : vector<1x8xf32>
      %c0_31 = arith.constant 0 : index
      %c0_32 = arith.constant 0 : index
      %56 = vector.load %arg7[%c0_31, %c0_32] : memref<8x128xf32, #tpu.memory_space<vmem>>, vector<8x128xf32>
      %cst_33 = arith.constant dense<0.000000e+00> : vector<1x128xf32>
      %57 = tpu.matmul %52, %56, %cst_33 {dimension_numbers = #tpu.dot_dimension_numbers<[1], [0], [0], [1], [0, 0, 1, 1], [], []>} : vector<1x8xf32>, vector<8x128xf32>, vector<1x128xf32> -> vector<1x128xf32>
      %c0_34 = arith.constant 0 : index
      %c0_35 = arith.constant 0 : index
      %58 = vector.load %arg7[%c0_34, %c0_35] : memref<8x128xf32, #tpu.memory_space<vmem>>, vector<8x128xf32>
      %cst_36 = arith.constant dense<0.000000e+00> : vector<1x128xf32>
      %59 = tpu.matmul %55, %58, %cst_36 {dimension_numbers = #tpu.dot_dimension_numbers<[1], [0], [0], [1], [0, 0, 1, 1], [], []>} : vector<1x8xf32>, vector<8x128xf32>, vector<1x128xf32> -> vector<1x128xf32>
      %60 = vector.broadcast %57 : vector<1x128xf32> to vector<32x128xf32>
      %61 = arith.mulf %32, %60 : vector<32x128xf32>
      %62 = vector.broadcast %59 : vector<1x128xf32> to vector<32x128xf32>
      %63 = arith.addf %61, %62 : vector<32x128xf32>
      %cst_37 = arith.constant 0.000000e+00 : f32
      %64 = vector.broadcast %cst_37 : f32 to vector<32x128xf32>
      %65 = arith.maximumf %63, %64 : vector<32x128xf32>
      %c0_38 = arith.constant 0 : index
      %c0_39 = arith.constant 0 : index
      %66 = vector.load %arg8[%c0_38, %c0_39] : memref<32x128xf32, #tpu.memory_space<vmem>>, vector<32x128xf32>
      tpu.vector_store %arg8[%c0_38, %c0_39], %65 {strides = array<i32>} : memref<32x128xf32, #tpu.memory_space<vmem>>, vector<32x128xf32>,
    } else {
    }
    return
  }
  func.func @transform_0(%arg0: i32, %arg1: i32) -> (i32, i32) {
    %c0_i32 = arith.constant 0 : i32
    %c0_i32_0 = arith.constant 0 : i32
    %c0_i32_1 = arith.constant 0 : i32
    return %c0_i32, %c0_i32_0 : i32, i32
  }
  func.func @transform_1(%arg0: i32, %arg1: i32) -> (i32, i32) {
    %c0_i32 = arith.constant 0 : i32
    %c0_i32_0 = arith.constant 0 : i32
    %c0_i32_1 = arith.constant 0 : i32
    return %c0_i32, %c0_i32_0 : i32, i32
  }
  func.func @transform_2(%arg0: i32, %arg1: i32) -> (i32, i32) {
    %c0_i32 = arith.constant 0 : i32
    %c0_i32_0 = arith.constant 0 : i32
    %c0_i32_1 = arith.constant 0 : i32
    return %c0_i32, %c0_i32_0 : i32, i32
  }
  func.func @transform_3(%arg0: i32, %arg1: i32) -> (i32, i32) {
    %c0_i32 = arith.constant 0 : i32
    %c0_i32_0 = arith.constant 0 : i32
    %c0_i32_1 = arith.constant 0 : i32
    return %c0_i32, %c0_i32_0 : i32, i32
  }
  func.func @transform_4(%arg0: i32, %arg1: i32) -> (i32, i32) {
    %c0_i32 = arith.constant 0 : i32
    %c0_i32_0 = arith.constant 0 : i32
    %c0_i32_1 = arith.constant 0 : i32
    return %c0_i32, %c0_i32_0 : i32, i32
  }
  func.func @transform_5(%arg0: i32, %arg1: i32) -> (i32, i32) {
    %c0_i32 = arith.constant 0 : i32
    %c0_i32_0 = arith.constant 0 : i32
    %c0_i32_1 = arith.constant 0 : i32
    return %c0_i32, %c0_i32_0 : i32, i32
  }
  func.func @transform_6(%arg0: i32, %arg1: i32) -> (i32, i32) {
    %c0_i32 = arith.constant 0 : i32
    %c0_i32_0 = arith.constant 0 : i32
    %c0_i32_1 = arith.constant 0 : i32
    return %c0_i32, %c0_i32_0 : i32, i32
  }
}

</mosaic_0001>

<llo_original>
// kernel: tpu_custom_call.1
$region0: #{tpu_custom_call.1}
  #allocation0 [shape = 'u32[]', space=smem, size = 0x4, offset = 0x4, fixed_abs, tag = 'smem constant byte address 0x4 - core index']
  #allocation1 [shape = 'u32[144,128]{1,0:T(1,128)}', space=vmem, size = 0x12000, scoped, tag = 'internal scratch']
  %s0 = inlined_call_operand.vmem [shape: f32[36,64], index: 0, kind: input, shape index: {}]
  %s1 = inlined_call_operand.hbm [shape: f32[192,128], index: 1, kind: input, shape index: {}]
  %s2 = inlined_call_operand.vmem [shape: f32[1,8], index: 2, kind: input, shape index: {}]
  %s3 = inlined_call_operand.vmem [shape: f32[1,8], index: 3, kind: input, shape index: {}]
  %s4 = inlined_call_operand.vmem [shape: f32[128,8], index: 4, kind: input, shape index: {}]
  %s5 = inlined_call_operand.vmem [shape: f32[8,128], index: 5, kind: input, shape index: {}]
  %s6 = inlined_call_operand.hbm [shape: f32[32,128], index: 6, kind: output, shape index: {}]
  %s7 = sld [smem:[#allocation0]]
  $region65: #{tpu_custom_call.1} parent=0
    _
  %s9 = ssub.s32 1, %s7
  %s10 = scalar_select 0, %s9, %s7
  $region1: #{tpu_custom_call.1} parent=0
    #allocation2 [shape = 'u8[98304]{0}', space=vmem, size = 0x18000, scoped, tag = 'input window, operand 1, single buffered']
    #allocation3 [shape = 's32[2]{0}', space=sflag, size = 0x8, scoped, tag = 'scoped memory for tpu_custom_call.1']
    #allocation4 [shape = 's32[2]{0}', space=sflag, size = 0x8, scoped, tag = 'scoped memory for tpu_custom_call.1']
    #allocation5 [shape = 'u8[16384]{0}', space=vmem, size = 0x4000, scoped, tag = 'output window, operand 0, single buffered']
    %11 = vsyncpa [#allocation3], 0
    %12 = vsyncpa [#allocation4], 0
    loop: start=0, step=1, limit=6
    $region2: #{tpu_custom_call.1} parent=1 // loop_pre_header
      _
    $region3: #{tpu_custom_call.1} parent=1 // loop_header
      %s14 = sphi 0, %s18
      %p15 = scmp.ge.s32.totalorder %s14, 6
      %s21 = sphi 0, %s33
      %s22 = sphi 0, %s29
      %s23 = sphi 0, %s21
      %s24 = sphi 0, %s22
      %s25 = sphi 0, %s23
      %s26 = sphi 0, %s24
      %s34 = sphi 0, %s34
      %s36 = sphi 0, %s34
      %s37 = sphi 0, %s36
      %s51 = sphi 0, %s37
      %s55 = sphi 0, %s55
      %s57 = sphi 0, %s55
      %s58 = sphi 0, %s57
      %s72 = sphi 0, %s58
      %s76 = sphi 0, %s76
      %s78 = sphi 0, %s76
      %s79 = sphi 0, %s78
      %s93 = sphi 0, %s79
      %s97 = sphi 0, %s97
      %s99 = sphi 0, %s97
      %s100 = sphi 0, %s99
      %s114 = sphi 0, %s100
      %s118 = sphi 0, %s118
      %s120 = sphi 0, %s118
      %s121 = sphi 0, %s120
      %s135 = sphi 0, %s121
      %s139 = sphi 0, %s139
      %s141 = sphi 0, %s139
      %s142 = sphi 0, %s141
      %s156 = sphi 0, %s142
      %s160 = sphi 0, %s160
      %s162 = sphi 0, %s160
      %s163 = sphi 0, %s162
      %s177 = sphi 0, %s163
    $region4: #{tpu_custom_call.1} parent=1 // loop_header_branch
      %17 = sbr.rel (%p15) target = $region8
    $region5: #{tpu_custom_call.1} parent=1 // loop_body
      %s19 = ssub.s32 %s14, 1
      %s20 = ssub.s32 %s14, 2
      %s27 = sadd.s32 1, %s22
      %p28 = scmp.ge.s32.totalorder %s27, 2
      %s29 = scalar_select %p28, 0, %s27
      %s30 = sadd.s32 1, %s21
      %s31 = scalar_select %p28, %s30, %s21
      %p32 = scmp.ge.s32.totalorder %s31, 2
      %s33 = scalar_select %p32, 0, %s31
      %s35 = sadd.s32 %s34, 1
      %p38 = scmp.eq.s32.totalorder %s14, 3
      %p39 = scmp.ne.s32.totalorder %s34, %s36
      %p40 = scmp.eq.s32.totalorder %s14, 0
      %p41 = por %p39, %p40
      %p42 = scmp.ne.s32.totalorder %s34, %s36
      %p43 = scmp.eq.s32.totalorder %s19, 3
      %p44 = por %p42, %p43
      %p45 = scmp.ne.s32.totalorder %s36, %s37
      %p46 = scmp.eq.s32.totalorder %s19, 0
      %p47 = por %p45, %p46
      %p48 = scmp.ne.s32.totalorder %s36, %s37
      %p49 = scmp.eq.s32.totalorder %s20, 3
      %p50 = por %p48, %p49
      %p52 = scmp.ne.s32.totalorder %s37, %s51
      %p53 = scmp.eq.s32.totalorder %s20, 0
      %p54 = por %p52, %p53
      %s56 = sadd.s32 %s55, 1
      %p59 = scmp.eq.s32.totalorder %s14, 3
      %p60 = scmp.ne.s32.totalorder %s55, %s57
      %p61 = scmp.eq.s32.totalorder %s14, 0
      %p62 = por %p60, %p61
      %p63 = scmp.ne.s32.totalorder %s55, %s57
      %p64 = scmp.eq.s32.totalorder %s19, 3
      %p65 = por %p63, %p64
      %p66 = scmp.ne.s32.totalorder %s57, %s58
      %p67 = scmp.eq.s32.totalorder %s19, 0
      %p68 = por %p66, %p67
      %p69 = scmp.ne.s32.totalorder %s57, %s58
      %p70 = scmp.eq.s32.totalorder %s20, 3
      %p71 = por %p69, %p70
      %p73 = scmp.ne.s32.totalorder %s58, %s72
      %p74 = scmp.eq.s32.totalorder %s20, 0
      %p75 = por %p73, %p74
      %s77 = sadd.s32 %s76, 1
      %p80 = scmp.eq.s32.totalorder %s14, 3
      %p81 = scmp.ne.s32.totalorder %s76, %s78
      %p82 = scmp.eq.s32.totalorder %s14, 0
      %p83 = por %p81, %p82
      %p84 = scmp.ne.s32.totalorder %s76, %s78
      %p85 = scmp.eq.s32.totalorder %s19, 3
      %p86 = por %p84, %p85
      %p87 = scmp.ne.s32.totalorder %s78, %s79
      %p88 = scmp.eq.s32.totalorder %s19, 0
      %p89 = por %p87, %p88
      %p90 = scmp.ne.s32.totalorder %s78, %s79
      %p91 = scmp.eq.s32.totalorder %s20, 3
      %p92 = por %p90, %p91
      %p94 = scmp.ne.s32.totalorder %s79, %s93
      %p95 = scmp.eq.s32.totalorder %s20, 0
      %p96 = por %p94, %p95
      %s98 = sadd.s32 %s97, 1
      %p101 = scmp.eq.s32.totalorder %s14, 3
      %p102 = scmp.ne.s32.totalorder %s97, %s99
      %p103 = scmp.eq.s32.totalorder %s14, 0
      %p104 = por %p102, %p103
      %p105 = scmp.ne.s32.totalorder %s97, %s99
      %p106 = scmp.eq.s32.totalorder %s19, 3
      %p107 = por %p105, %p106
      %p108 = scmp.ne.s32.totalorder %s99, %s100
      %p109 = scmp.eq.s32.totalorder %s19, 0
      %p110 = por %p108, %p109
      %p111 = scmp.ne.s32.totalorder %s99, %s100
      %p112 = scmp.eq.s32.totalorder %s20, 3
      %p113 = por %p111, %p112
      %p115 = scmp.ne.s32.totalorder %s100, %s114
      %p116 = scmp.eq.s32.totalorder %s20, 0
      %p117 = por %p115, %p116
      %s119 = sadd.s32 %s118, 1
      %p122 = scmp.eq.s32.totalorder %s14, 3
      %p123 = scmp.ne.s32.totalorder %s118, %s120
      %p124 = scmp.eq.s32.totalorder %s14, 0
      %p125 = por %p123, %p124
      %p126 = scmp.ne.s32.totalorder %s118, %s120
      %p127 = scmp.eq.s32.totalorder %s19, 3
      %p128 = por %p126, %p127
      %p129 = scmp.ne.s32.totalorder %s120, %s121
      %p130 = scmp.eq.s32.totalorder %s19, 0
      %p131 = por %p129, %p130
      %p132 = scmp.ne.s32.totalorder %s120, %s121
      %p133 = scmp.eq.s32.totalorder %s20, 3
      %p134 = por %p132, %p133
      %p136 = scmp.ne.s32.totalorder %s121, %s135
      %p137 = scmp.eq.s32.totalorder %s20, 0
      %p138 = por %p136, %p137
      %s140 = sadd.s32 %s139, 1
      %p143 = scmp.eq.s32.totalorder %s14, 3
      %p144 = scmp.ne.s32.totalorder %s139, %s141
      %p145 = scmp.eq.s32.totalorder %s14, 0
      %p146 = por %p144, %p145
      %p147 = scmp.ne.s32.totalorder %s139, %s141
      %p148 = scmp.eq.s32.totalorder %s19, 3
      %p149 = por %p147, %p148
      %p150 = scmp.ne.s32.totalorder %s141, %s142
      %p151 = scmp.eq.s32.totalorder %s19, 0
      %p152 = por %p150, %p151
      %p153 = scmp.ne.s32.totalorder %s141, %s142
      %p154 = scmp.eq.s32.totalorder %s20, 3
      %p155 = por %p153, %p154
      %p157 = scmp.ne.s32.totalorder %s142, %s156
      %p158 = scmp.eq.s32.totalorder %s20, 0
      %p159 = por %p157, %p158
      %s161 = sadd.s32 %s160, 1
      %p164 = scmp.eq.s32.totalorder %s14, 3
      %p165 = scmp.ne.s32.totalorder %s160, %s162
      %p166 = scmp.eq.s32.totalorder %s14, 0
      %p167 = por %p165, %p166
      %p168 = scmp.ne.s32.totalorder %s160, %s162
      %p169 = scmp.eq.s32.totalorder %s19, 3
      %p170 = por %p168, %p169
      %p171 = scmp.ne.s32.totalorder %s162, %s163
      %p172 = scmp.eq.s32.totalorder %s19, 0
      %p173 = por %p171, %p172
      %p174 = scmp.ne.s32.totalorder %s162, %s163
      %p175 = scmp.eq.s32.totalorder %s20, 3
      %p176 = por %p174, %p175
      %p178 = scmp.ne.s32.totalorder %s163, %s177
      %p179 = scmp.eq.s32.totalorder %s20, 0
      %p180 = por %p178, %p179
      %p181 = scmp.le.s32.totalorder 1, %s14
      %p182 = scmp.lt.s32.totalorder %s14, 5
      %p183 = pnand %p181, %p182
      %p184 = pneg %p183
      // Predicated region
      $region9: #{tpu_custom_call.1} parent=5 // pred_check
        _
      $region10: #{tpu_custom_call.1} parent=5 // pred_check_branch
        %186 = sbr.rel (%p183) target = $region12
      $region11: #{tpu_custom_call.1} parent=5 // pred_region
        %s187 = ssub.s32 %s14, 1
        // Predicated region
        $region13: #{tpu_custom_call.1} parent=11 // pred_check
          %p188 = pneg %p47
        $region14: #{tpu_custom_call.1} parent=11 // pred_check_branch
          %190 = sbr.rel (%p188) target = $region16
        $region15: #{tpu_custom_call.1} parent=11 // pred_region
          _
        $region16: #{tpu_custom_call.1} parent=11 // pred_fallthru
          _
        // Predicated region
        $region17: #{tpu_custom_call.1} parent=11 // pred_check
          %p191 = pneg %p68
        $region18: #{tpu_custom_call.1} parent=11 // pred_check_branch
          %193 = sbr.rel (%p191) target = $region20
        $region19: #{tpu_custom_call.1} parent=11 // pred_region
          %s195 = ssub.s32 3072, 3072
          %196 = vsyncadd [#allocation3], %s195
          %s197 = sshll.u32 [#allocation2], 4
          %s198 = int_to_ptr.vmem [resolvable:$true] %s197
          %203 = dma.hbm_to_vmem [thread:$0]  %s1, 3072, %s198, [#allocation3], 128, 128, 8
        $region20: #{tpu_custom_call.1} parent=11 // pred_fallthru
          _
        // Predicated region
        $region21: #{tpu_custom_call.1} parent=11 // pred_check
          %p204 = pneg %p89
        $region22: #{tpu_custom_call.1} parent=11 // pred_check_branch
          %206 = sbr.rel (%p204) target = $region24
        $region23: #{tpu_custom_call.1} parent=11 // pred_region
          _
        $region24: #{tpu_custom_call.1} parent=11 // pred_fallthru
          _
        // Predicated region
        $region25: #{tpu_custom_call.1} parent=11 // pred_check
          %p207 = pneg %p110
        $region26: #{tpu_custom_call.1} parent=11 // pred_check_branch
          %209 = sbr.rel (%p207) target = $region28
        $region27: #{tpu_custom_call.1} parent=11 // pred_region
          _
        $region28: #{tpu_custom_call.1} parent=11 // pred_fallthru
          _
        // Predicated region
        $region29: #{tpu_custom_call.1} parent=11 // pred_check
          %p210 = pneg %p131
        $region30: #{tpu_custom_call.1} parent=11 // pred_check_branch
          %212 = sbr.rel (%p210) target = $region32
        $region31: #{tpu_custom_call.1} parent=11 // pred_region
          _
        $region32: #{tpu_custom_call.1} parent=11 // pred_fallthru
          _
        // Predicated region
        $region33: #{tpu_custom_call.1} parent=11 // pred_check
          %p213 = pneg %p152
        $region34: #{tpu_custom_call.1} parent=11 // pred_check_branch
          %215 = sbr.rel (%p213) target = $region36
        $region35: #{tpu_custom_call.1} parent=11 // pred_region
          _
        $region36: #{tpu_custom_call.1} parent=11 // pred_fallthru
          _
      $region12: #{tpu_custom_call.1} parent=5 // pred_fallthru
        _
      %p216 = scmp.lt.s32.totalorder %s14, 4
      // Predicated region
      $region37: #{tpu_custom_call.1} parent=5 // pred_check
        %p217 = pneg %p216
      $region38: #{tpu_custom_call.1} parent=5 // pred_check_branch
        %219 = sbr.rel (%p217) target = $region40
      $region39: #{tpu_custom_call.1} parent=5 // pred_region
        _
      $region40: #{tpu_custom_call.1} parent=5 // pred_fallthru
        _
      %p220 = scmp.le.s32.totalorder 1, %s14
      %p221 = scmp.lt.s32.totalorder %s14, 5
      %p222 = pnand %p220, %p221
      %p223 = pneg %p222
      // Predicated region
      $region41: #{tpu_custom_call.1} parent=5 // pred_check
        _
      $region42: #{tpu_custom_call.1} parent=5 // pred_check_branch
        %225 = sbr.rel (%p222) target = $region44
      $region43: #{tpu_custom_call.1} parent=5 // pred_region
        %s226 = ssub.s32 %s14, 1
        // Predicated region
        $region45: #{tpu_custom_call.1} parent=43 // pred_check
          %p227 = pneg %p68
        $region46: #{tpu_custom_call.1} parent=43 // pred_check_branch
          %229 = sbr.rel (%p227) target = $region48
        $region47: #{tpu_custom_call.1} parent=43 // pred_region
          %230 = dma.done [#allocation3], 3072
        $region48: #{tpu_custom_call.1} parent=43 // pred_fallthru
          _
        %p231 = pneg %p47
        %p232 = pneg %p44
        %p233 = pneg %p68
        %p234 = pneg %p65
        %p235 = pneg %p89
        %p236 = pneg %p86
        %p237 = pneg %p110
        %p238 = pneg %p107
        %p239 = pneg %p131
        %p240 = pneg %p128
        %p241 = pneg %p152
        %p242 = pneg %p149
        %p243 = pneg %p173
        %p244 = pneg %p170
        %s245 = smul.u32 %s23, 18
        %s246 = smul.u32 %s24, 8
        %s247 = sadd.s32 %s245, %s246
        %s248 = smul.u32 %s23, 16
        %s249 = sadd.s32 %s248, %s246
        %s250 = scalar_lea.vmem %s0, %s247
        %v251 = vld [vmem:[%s250] sm:$0xff]
        %v252 = vld [vmem:[#allocation2] sm:$0xff]
        %v253 = vld [vmem:[#allocation2 + $0x8] sm:$0xff]
        %v254 = vld [vmem:[#allocation2 + $0x10] sm:$0xff]
        %v255 = vld [vmem:[#allocation2 + $0x18] sm:$0xff]
        %v256 = vld [vmem:[#allocation2 + $0x20] sm:$0xff]
        %v257 = vld [vmem:[#allocation2 + $0x28] sm:$0xff]
        %v258 = vld [vmem:[#allocation2 + $0x30] sm:$0xff]
        %v259 = vld [vmem:[#allocation2 + $0x38] sm:$0xff]
        %s260 = sadd.s32 %s247, 1
        %s261 = scalar_lea.vmem %s0, %s260
        %v262 = vld [vmem:[%s261] sm:$0xff]
        %v263 = vld [vmem:[#allocation2 + $0x40] sm:$0xff]
        %v264 = vld [vmem:[#allocation2 + $0x48] sm:$0xff]
        %v265 = vld [vmem:[#allocation2 + $0x50] sm:$0xff]
        %v266 = vld [vmem:[#allocation2 + $0x58] sm:$0xff]
        %v267 = vld [vmem:[#allocation2 + $0x60] sm:$0xff]
        %v268 = vld [vmem:[#allocation2 + $0x68] sm:$0xff]
        %v269 = vld [vmem:[#allocation2 + $0x70] sm:$0xff]
        %v270 = vld [vmem:[#allocation2 + $0x78] sm:$0xff]
        %vm271 = vcmask 523264
        %v273 = vsel %vm271, %v262, 0
        %275 = vmatprep.subr.mxu0 0.0
        %276 = vmatpush1.msra.mxu0 %v263
        %277 = vmatprep.subr.mxu0 0.0
        %278 = vmatpush1.msra.mxu0 %v264
        %279 = vmatprep.subr.mxu0 0.0
        %280 = vmatpush1.msra.mxu0 %v265
        %281 = vmatprep.subr.mxu0 0.0
        %282 = vmatpush1.msra.mxu0 %v266
        %283 = vmatprep.subr.mxu0 0.0
        %284 = vmatpush1.msra.mxu0 %v267
        %285 = vmatprep.subr.mxu0 0.0
        %286 = vmatpush1.msra.mxu0 %v268
        %287 = vmatprep.subr.mxu0 0.0
        %288 = vmatpush1.msra.mxu0 %v269
        %289 = vmatprep.subr.mxu0 0.0
        %290 = vmatpush1.msra.mxu0 %v270
        %291 = vmatprep.subr.mxu0 0.0
        %292 = vmatpush1.msra.mxu0 0.0
        %293 = vmatprep.subr.mxu0 0.0
        %294 = vmatpush1.msra.mxu0 0.0
        %295 = vmatprep.subr.mxu0 0.0
        %296 = vmatpush1.msra.mxu0 0.0
        %297 = vmatprep.subr.mxu0 0.0
        %298 = vmatpush1.msra.mxu0 0.0
        %299 = vmatprep.subr.mxu0 0.0
        %300 = vmatpush1.msra.mxu0 0.0
        %301 = vmatprep.subr.mxu0 0.0
        %302 = vmatpush1.msra.mxu0 0.0
        %303 = vmatprep.subr.mxu0 0.0
        %304 = vmatpush1.msra.mxu0 0.0
        %305 = vmatprep.subr.mxu0 0.0
        %306 = vmatpush1.msra.mxu0 0.0
        %307 = vmatprep.subr.mxu0 0.0
        %308 = vmatpush1.msra.mxu0 0.0
        %309 = vmatprep.subr.mxu0 0.0
        %310 = vmatpush1.msra.mxu0 0.0
        %311 = vmatprep.subr.mxu0 0.0
        %312 = vmatpush1.msra.mxu0 0.0
        %313 = vmatprep.subr.mxu0 0.0
        %314 = vmatpush1.msra.mxu0 0.0
        %315 = vmatprep.subr.mxu0 0.0
        %316 = vmatpush1.msra.mxu0 0.0
        %317 = vmatprep.subr.mxu0 0.0
        %318 = vmatpush1.msra.mxu0 0.0
        %319 = vmatprep.subr.mxu0 0.0
        %320 = vmatpush1.msra.mxu0 0.0
        %321 = vmatprep.subr.mxu0 0.0
        %322 = vmatpush1.msra.mxu0 0.0
        %323 = vmatprep.subr.mxu0 0.0
        %324 = vmatpush1.msra.mxu0 0.0
        %325 = vmatprep.subr.mxu0 0.0
        %326 = vmatpush1.msra.mxu0 0.0
        %327 = vmatprep.subr.mxu0 0.0
        %328 = vmatpush1.msra.mxu0 0.0
        %329 = vmatprep.subr.mxu0 0.0
        %330 = vmatpush1.msra.mxu0 0.0
        %331 = vmatprep.subr.mxu0 0.0
        %332 = vmatpush1.msra.mxu0 0.0
        %333 = vmatprep.subr.mxu0 0.0
        %334 = vmatpush1.msra.mxu0 0.0
        %335 = vmatprep.subr.mxu0 0.0
        %336 = vmatpush1.msra.mxu0 0.0
        %337 = vmatprep.subr.mxu0 0.0
        %338 = vmatpush1.msra.mxu0 0.0
        %339 = vmatprep.mubr.f32.mxu0 0.0
        %340 = vmatmul.mubr.f32.gmra.mrb[0].mxu0 %v273
        %v341 = vpop.f32.mrb[0].mxu0
        %v342 = vadd.f32 0.0, %v341
        %v343 = vpop.f32.mrb[0].mxu0
        %344 = vdwg.mxu0
        %v346 = vsel %vm271, %v251, 0
        %348 = vmatprep.subr.mxu0 0.0
        %349 = vmatpush1.msra.mxu0 %v252
        %350 = vmatprep.subr.mxu0 0.0
        %351 = vmatpush1.msra.mxu0 %v253
        %352 = vmatprep.subr.mxu0 0.0
        %353 = vmatpush1.msra.mxu0 %v254
        %354 = vmatprep.subr.mxu0 0.0
        %355 = vmatpush1.msra.mxu0 %v255
        %356 = vmatprep.subr.mxu0 0.0
        %357 = vmatpush1.msra.mxu0 %v256
        %358 = vmatprep.subr.mxu0 0.0
        %359 = vmatpush1.msra.mxu0 %v257
        %360 = vmatprep.subr.mxu0 0.0
        %361 = vmatpush1.msra.mxu0 %v258
        %362 = vmatprep.subr.mxu0 0.0
        %363 = vmatpush1.msra.mxu0 %v259
        %364 = vmatprep.subr.mxu0 0.0
        %365 = vmatpush1.msra.mxu0 0.0
        %366 = vmatprep.subr.mxu0 0.0
        %367 = vmatpush1.msra.mxu0 0.0
        %368 = vmatprep.subr.mxu0 0.0
        %369 = vmatpush1.msra.mxu0 0.0
        %370 = vmatprep.subr.mxu0 0.0
        %371 = vmatpush1.msra.mxu0 0.0
        %372 = vmatprep.subr.mxu0 0.0
        %373 = vmatpush1.msra.mxu0 0.0
        %374 = vmatprep.subr.mxu0 0.0
        %375 = vmatpush1.msra.mxu0 0.0
        %376 = vmatprep.subr.mxu0 0.0
        %377 = vmatpush1.msra.mxu0 0.0
        %378 = vmatprep.subr.mxu0 0.0
        %379 = vmatpush1.msra.mxu0 0.0
        %380 = vmatprep.subr.mxu0 0.0
        %381 = vmatpush1.msra.mxu0 0.0
        %382 = vmatprep.subr.mxu0 0.0
        %383 = vmatpush1.msra.mxu0 0.0
        %384 = vmatprep.subr.mxu0 0.0
        %385 = vmatpush1.msra.mxu0 0.0
        %386 = vmatprep.subr.mxu0 0.0
        %387 = vmatpush1.msra.mxu0 0.0
        %388 = vmatprep.subr.mxu0 0.0
        %389 = vmatpush1.msra.mxu0 0.0
        %390 = vmatprep.subr.mxu0 0.0
        %391 = vmatpush1.msra.mxu0 0.0
        %392 = vmatprep.subr.mxu0 0.0
        %393 = vmatpush1.msra.mxu0 0.0
        %394 = vmatprep.subr.mxu0 0.0
        %395 = vmatpush1.msra.mxu0 0.0
        %396 = vmatprep.subr.mxu0 0.0
        %397 = vmatpush1.msra.mxu0 0.0
        %398 = vmatprep.subr.mxu0 0.0
        %399 = vmatpush1.msra.mxu0 0.0
        %400 = vmatprep.subr.mxu0 0.0
        %401 = vmatpush1.msra.mxu0 0.0
        %402 = vmatprep.subr.mxu0 0.0
        %403 = vmatpush1.msra.mxu0 0.0
        %404 = vmatprep.subr.mxu0 0.0
        %405 = vmatpush1.msra.mxu0 0.0
        %406 = vmatprep.subr.mxu0 0.0
        %407 = vmatpush1.msra.mxu0 0.0
        %408 = vmatprep.subr.mxu0 0.0
        %409 = vmatpush1.msra.mxu0 0.0
        %410 = vmatprep.subr.mxu0 0.0
        %411 = vmatpush1.msra.mxu0 0.0
        %412 = vmatprep.mubr.f32.mxu0 0.0
        %413 = vmatmul.mubr.f32.gmra.mrb[0].mxu0 %v346
        %v414 = vpop.f32.mrb[0].mxu0
        %v415 = vadd.f32 %v342, %v414
        %v416 = vpop.f32.mrb[0].mxu0
        %417 = vdwg.mxu0
        %s418 = sadd.s32 %s247, 2
        %s419 = scalar_lea.vmem %s0, %s418
        %v420 = vld [vmem:[%s419] sm:$0xff]
        %v421 = vld [vmem:[#allocation2 + $0x80] sm:$0xff]
        %v422 = vld [vmem:[#allocation2 + $0x88] sm:$0xff]
        %v423 = vld [vmem:[#allocation2 + $0x90] sm:$0xff]
        %v424 = vld [vmem:[#allocation2 + $0x98] sm:$0xff]
        %v425 = vld [vmem:[#allocation2 + $0xa0] sm:$0xff]
        %v426 = vld [vmem:[#allocation2 + $0xa8] sm:$0xff]
        %v427 = vld [vmem:[#allocation2 + $0xb0] sm:$0xff]
        %v428 = vld [vmem:[#allocation2 + $0xb8] sm:$0xff]
        %v430 = vsel %vm271, %v420, 0
        %432 = vmatprep.subr.mxu0 0.0
        %433 = vmatpush1.msra.mxu0 %v421
        %434 = vmatprep.subr.mxu0 0.0
        %435 = vmatpush1.msra.mxu0 %v422
        %436 = vmatprep.subr.mxu0 0.0
        %437 = vmatpush1.msra.mxu0 %v423
        %438 = vmatprep.subr.mxu0 0.0
        %439 = vmatpush1.msra.mxu0 %v424
        %440 = vmatprep.subr.mxu0 0.0
        %441 = vmatpush1.msra.mxu0 %v425
        %442 = vmatprep.subr.mxu0 0.0
        %443 = vmatpush1.msra.mxu0 %v426
        %444 = vmatprep.subr.mxu0 0.0
        %445 = vmatpush1.msra.mxu0 %v427
        %446 = vmatprep.subr.mxu0 0.0
        %447 = vmatpush1.msra.mxu0 %v428
        %448 = vmatprep.subr.mxu0 0.0
        %449 = vmatpush1.msra.mxu0 0.0
        %450 = vmatprep.subr.mxu0 0.0
        %451 = vmatpush1.msra.mxu0 0.0
        %452 = vmatprep.subr.mxu0 0.0
        %453 = vmatpush1.msra.mxu0 0.0
        %454 = vmatprep.subr.mxu0 0.0
        %455 = vmatpush1.msra.mxu0 0.0
        %456 = vmatprep.subr.mxu0 0.0
        %457 = vmatpush1.msra.mxu0 0.0
        %458 = vmatprep.subr.mxu0 0.0
        %459 = vmatpush1.msra.mxu0 0.0
        %460 = vmatprep.subr.mxu0 0.0
        %461 = vmatpush1.msra.mxu0 0.0
        %462 = vmatprep.subr.mxu0 0.0
        %463 = vmatpush1.msra.mxu0 0.0
        %464 = vmatprep.subr.mxu0 0.0
        %465 = vmatpush1.msra.mxu0 0.0
        %466 = vmatprep.subr.mxu0 0.0
        %467 = vmatpush1.msra.mxu0 0.0
        %468 = vmatprep.subr.mxu0 0.0
        %469 = vmatpush1.msra.mxu0 0.0
        %470 = vmatprep.subr.mxu0 0.0
        %471 = vmatpush1.msra.mxu0 0.0
        %472 = vmatprep.subr.mxu0 0.0
        %473 = vmatpush1.msra.mxu0 0.0
        %474 = vmatprep.subr.mxu0 0.0
        %475 = vmatpush1.msra.mxu0 0.0
        %476 = vmatprep.subr.mxu0 0.0
        %477 = vmatpush1.msra.mxu0 0.0
        %478 = vmatprep.subr.mxu0 0.0
        %479 = vmatpush1.msra.mxu0 0.0
        %480 = vmatprep.subr.mxu0 0.0
        %481 = vmatpush1.msra.mxu0 0.0
        %482 = vmatprep.subr.mxu0 0.0
        %483 = vmatpush1.msra.mxu0 0.0
        %484 = vmatprep.subr.mxu0 0.0
        %485 = vmatpush1.msra.mxu0 0.0
        %486 = vmatprep.subr.mxu0 0.0
        %487 = vmatpush1.msra.mxu0 0.0
        %488 = vmatprep.subr.mxu0 0.0
        %489 = vmatpush1.msra.mxu0 0.0
        %490 = vmatprep.subr.mxu0 0.0
        %491 = vmatpush1.msra.mxu0 0.0
        %492 = vmatprep.subr.mxu0 0.0
        %493 = vmatpush1.msra.mxu0 0.0
        %494 = vmatprep.subr.mxu0 0.0
        %495 = vmatpush1.msra.mxu0 0.0
        %496 = vmatprep.mubr.f32.mxu0 0.0
        %497 = vmatmul.mubr.f32.gmra.mrb[0].mxu0 %v430
        %v498 = vpop.f32.mrb[0].mxu0
        %v499 = vadd.f32 0.0, %v498
        %v500 = vpop.f32.mrb[0].mxu0
        %501 = vdwg.mxu0
        %v502 = vadd.f32 %v415, %v499
        %s503 = scalar_lea.vmem [#allocation5], %s249
        %504 = vst [vmem:[%s503] sm:$0xff] %v502
        %p505 = scmp.eq.s32.totalorder %s23, 1
        %p506 = scmp.eq.s32.totalorder %s24, 1
        %p507 = pnand %p505, %p506
        %p508 = pneg %p507
        // Predicated region
        $region49: #{tpu_custom_call.1} parent=43 // pred_check
          _
        $region50: #{tpu_custom_call.1} parent=43 // pred_check_branch
          %510 = sbr.rel (%p507) target = $region52
        $region51: #{tpu_custom_call.1} parent=43 // pred_region
          %v511 = vld [vmem:[#allocation5] sm:$0xff]
          %v512 = vld [vmem:[#allocation5 + $0x8] sm:$0xff]
          %v513 = vld [vmem:[#allocation5 + $0x10] sm:$0xff]
          %v514 = vld [vmem:[#allocation5 + $0x18] sm:$0xff]
          %v515 = vadd.f32 %v511, %v512
          %v516 = vadd.f32 %v515, %v513
          %v517 = vadd.f32 %v516, %v514
          %v518 = vrot.slane %v517, 4
          %v519 = vadd.f32 %v517, %v518
          %v520 = vrot.slane %v519, 2
          %v521 = vadd.f32 %v519, %v520
          %v522 = vrot.slane %v521, 1
          %v523 = vadd.f32 %v521, %v522
          %v524 = vmul.f32 %v511, %v511
          %v525 = vmul.f32 %v512, %v512
          %v526 = vmul.f32 %v513, %v513
          %v527 = vmul.f32 %v514, %v514
          %v528 = vadd.f32 %v524, %v525
          %v529 = vadd.f32 %v528, %v526
          %v530 = vadd.f32 %v529, %v527
          %v531 = vrot.slane %v530, 4
          %v532 = vadd.f32 %v530, %v531
          %v533 = vrot.slane %v532, 2
          %v534 = vadd.f32 %v532, %v533
          %v535 = vrot.slane %v534, 1
          %v536 = vadd.f32 %v534, %v535
          %v537 = vld [vmem:[%s4] sm:$0xff]
          %v538 = vld [vmem:[%s4 + $0x8] sm:$0xff]
          %v539 = vld [vmem:[%s4 + $0x10] sm:$0xff]
          %v540 = vld [vmem:[%s4 + $0x18] sm:$0xff]
          %v541 = vld [vmem:[%s4 + $0x20] sm:$0xff]
          %v542 = vld [vmem:[%s4 + $0x28] sm:$0xff]
          %v543 = vld [vmem:[%s4 + $0x30] sm:$0xff]
          %v544 = vld [vmem:[%s4 + $0x38] sm:$0xff]
          %v545 = vld [vmem:[%s4 + $0x40] sm:$0xff]
          %v546 = vld [vmem:[%s4 + $0x48] sm:$0xff]
          %v547 = vld [vmem:[%s4 + $0x50] sm:$0xff]
          %v548 = vld [vmem:[%s4 + $0x58] sm:$0xff]
          %v549 = vld [vmem:[%s4 + $0x60] sm:$0xff]
          %v550 = vld [vmem:[%s4 + $0x68] sm:$0xff]
          %v551 = vld [vmem:[%s4 + $0x70] sm:$0xff]
          %v552 = vld [vmem:[%s4 + $0x78] sm:$0xff]
          %553 = vmatprep.subr.mxu0 0.0
          %554 = vmatpush1.msra.mxu0 %v537
          %555 = vmatprep.subr.mxu0 0.0
          %556 = vmatpush1.msra.mxu0 %v538
          %557 = vmatprep.subr.mxu0 0.0
          %558 = vmatpush1.msra.mxu0 %v539
          %559 = vmatprep.subr.mxu0 0.0
          %560 = vmatpush1.msra.mxu0 %v540
          %561 = vmatprep.subr.mxu0 0.0
          %562 = vmatpush1.msra.mxu0 %v541
          %563 = vmatprep.subr.mxu0 0.0
          %564 = vmatpush1.msra.mxu0 %v542
          %565 = vmatprep.subr.mxu0 0.0
          %566 = vmatpush1.msra.mxu0 %v543
          %567 = vmatprep.subr.mxu0 0.0
          %568 = vmatpush1.msra.mxu0 %v544
          %569 = vmatprep.subr.mxu0 0.0
          %570 = vmatpush1.msra.mxu0 %v545
          %571 = vmatprep.subr.mxu0 0.0
          %572 = vmatpush1.msra.mxu0 %v546
          %573 = vmatprep.subr.mxu0 0.0
          %574 = vmatpush1.msra.mxu0 %v547
          %575 = vmatprep.subr.mxu0 0.0
          %576 = vmatpush1.msra.mxu0 %v548
          %577 = vmatprep.subr.mxu0 0.0
          %578 = vmatpush1.msra.mxu0 %v549
          %579 = vmatprep.subr.mxu0 0.0
          %580 = vmatpush1.msra.mxu0 %v550
          %581 = vmatprep.subr.mxu0 0.0
          %582 = vmatpush1.msra.mxu0 %v551
          %583 = vmatprep.subr.mxu0 0.0
          %584 = vmatpush1.msra.mxu0 %v552
          %585 = vmatprep.subr.mxu0 0.0
          %586 = vmatpush1.msra.mxu0 0.0
          %587 = vmatprep.subr.mxu0 0.0
          %588 = vmatpush1.msra.mxu0 0.0
          %589 = vmatprep.subr.mxu0 0.0
          %590 = vmatpush1.msra.mxu0 0.0
          %591 = vmatprep.subr.mxu0 0.0
          %592 = vmatpush1.msra.mxu0 0.0
          %593 = vmatprep.subr.mxu0 0.0
          %594 = vmatpush1.msra.mxu0 0.0
          %595 = vmatprep.subr.mxu0 0.0
          %596 = vmatpush1.msra.mxu0 0.0
          %597 = vmatprep.subr.mxu0 0.0
          %598 = vmatpush1.msra.mxu0 0.0
          %599 = vmatprep.subr.mxu0 0.0
          %600 = vmatpush1.msra.mxu0 0.0
          %601 = vmatprep.subr.mxu0 0.0
          %602 = vmatpush1.msra.mxu0 0.0
          %603 = vmatprep.subr.mxu0 0.0
          %604 = vmatpush1.msra.mxu0 0.0
          %605 = vmatprep.subr.mxu0 0.0
          %606 = vmatpush1.msra.mxu0 0.0
          %607 = vmatprep.subr.mxu0 0.0
          %608 = vmatpush1.msra.mxu0 0.0
          %609 = vmatprep.subr.mxu0 0.0
          %610 = vmatpush1.msra.mxu0 0.0
          %611 = vmatprep.subr.mxu0 0.0
          %612 = vmatpush1.msra.mxu0 0.0
          %613 = vmatprep.subr.mxu0 0.0
          %614 = vmatpush1.msra.mxu0 0.0
          %615 = vmatprep.subr.mxu0 0.0
          %616 = vmatpush1.msra.mxu0 0.0
          %617 = vmatprep.mubr.f32.mxu0 0.0
          %618 = vmatmul.mubr.f32.gmra.mrb[0].mxu0 %v523
          %v619 = vpop.f32.mrb[0].mxu0
          %v620 = vadd.f32 0.0, %v619
          %v621 = vpop.f32.mrb[0].mxu0
          %622 = vdwg.mxu0
          %623 = vmatprep.subr.mxu0 0.0
          %624 = vmatpush1.msra.mxu0 %v537
          %625 = vmatprep.subr.mxu0 0.0
          %626 = vmatpush1.msra.mxu0 %v538
          %627 = vmatprep.subr.mxu0 0.0
          %628 = vmatpush1.msra.mxu0 %v539
          %629 = vmatprep.subr.mxu0 0.0
          %630 = vmatpush1.msra.mxu0 %v540
          %631 = vmatprep.subr.mxu0 0.0
          %632 = vmatpush1.msra.mxu0 %v541
          %633 = vmatprep.subr.mxu0 0.0
          %634 = vmatpush1.msra.mxu0 %v542
          %635 = vmatprep.subr.mxu0 0.0
          %636 = vmatpush1.msra.mxu0 %v543
          %637 = vmatprep.subr.mxu0 0.0
          %638 = vmatpush1.msra.mxu0 %v544
          %639 = vmatprep.subr.mxu0 0.0
          %640 = vmatpush1.msra.mxu0 %v545
          %641 = vmatprep.subr.mxu0 0.0
          %642 = vmatpush1.msra.mxu0 %v546
          %643 = vmatprep.subr.mxu0 0.0
          %644 = vmatpush1.msra.mxu0 %v547
          %645 = vmatprep.subr.mxu0 0.0
          %646 = vmatpush1.msra.mxu0 %v548
          %647 = vmatprep.subr.mxu0 0.0
          %648 = vmatpush1.msra.mxu0 %v549
          %649 = vmatprep.subr.mxu0 0.0
          %650 = vmatpush1.msra.mxu0 %v550
          %651 = vmatprep.subr.mxu0 0.0
          %652 = vmatpush1.msra.mxu0 %v551
          %653 = vmatprep.subr.mxu0 0.0
          %654 = vmatpush1.msra.mxu0 %v552
          %655 = vmatprep.subr.mxu0 0.0
          %656 = vmatpush1.msra.mxu0 0.0
          %657 = vmatprep.subr.mxu0 0.0
          %658 = vmatpush1.msra.mxu0 0.0
          %659 = vmatprep.subr.mxu0 0.0
          %660 = vmatpush1.msra.mxu0 0.0
          %661 = vmatprep.subr.mxu0 0.0
          %662 = vmatpush1.msra.mxu0 0.0
          %663 = vmatprep.subr.mxu0 0.0
          %664 = vmatpush1.msra.mxu0 0.0
          %665 = vmatprep.subr.mxu0 0.0
          %666 = vmatpush1.msra.mxu0 0.0
          %667 = vmatprep.subr.mxu0 0.0
          %668 = vmatpush1.msra.mxu0 0.0
          %669 = vmatprep.subr.mxu0 0.0
          %670 = vmatpush1.msra.mxu0 0.0
          %671 = vmatprep.subr.mxu0 0.0
          %672 = vmatpush1.msra.mxu0 0.0
          %673 = vmatprep.subr.mxu0 0.0
          %674 = vmatpush1.msra.mxu0 0.0
          %675 = vmatprep.subr.mxu0 0.0
          %676 = vmatpush1.msra.mxu0 0.0
          %677 = vmatprep.subr.mxu0 0.0
          %678 = vmatpush1.msra.mxu0 0.0
          %679 = vmatprep.subr.mxu0 0.0
          %680 = vmatpush1.msra.mxu0 0.0
          %681 = vmatprep.subr.mxu0 0.0
          %682 = vmatpush1.msra.mxu0 0.0
          %683 = vmatprep.subr.mxu0 0.0
          %684 = vmatpush1.msra.mxu0 0.0
          %685 = vmatprep.subr.mxu0 0.0
          %686 = vmatpush1.msra.mxu0 0.0
          %687 = vmatprep.mubr.f32.mxu0 0.0
          %688 = vmatmul.mubr.f32.gmra.mrb[0].mxu0 %v536
          %v689 = vpop.f32.mrb[0].mxu0
          %v690 = vadd.f32 0.0, %v689
          %v691 = vpop.f32.mrb[0].mxu0
          %692 = vdwg.mxu0
          %v693 = vmul.f32 %v620, 0.001953125
          %v694 = vmul.f32 %v690, 0.001953125
          %v695 = vmul.f32 %v693, %v693
          %v696 = vsub.f32 %v694, %v695
          %v697 = vld [vmem:[%s2] sm:$0x1]
          %v698 = vadd.f32 %v696, 1e-05
          %v699 = vrsqrt.pop %v698
          %v700 = vmul.f32 %v697, %v699
          %v701 = vld [vmem:[%s3] sm:$0x1]
          %v702 = vmul.f32 %v693, %v700
          %v703 = vsub.f32 %v701, %v702
          %v704 = vld [vmem:[%s5] sm:$0xff]
          %vm705 = vcmask 64512
          %v707 = vsel %vm705, %v700, 0
          %709 = vmatprep.subr.mxu0 0.0
          %710 = vmatpush1.msra.mxu0 %v704
          %711 = vmatprep.subr.mxu0 0.0
          %712 = vmatpush1.msra.mxu0 0.0
          %713 = vmatprep.subr.mxu0 0.0
          %714 = vmatpush1.msra.mxu0 0.0
          %715 = vmatprep.subr.mxu0 0.0
          %716 = vmatpush1.msra.mxu0 0.0
          %717 = vmatprep.subr.mxu0 0.0
          %718 = vmatpush1.msra.mxu0 0.0
          %719 = vmatprep.subr.mxu0 0.0
          %720 = vmatpush1.msra.mxu0 0.0
          %721 = vmatprep.subr.mxu0 0.0
          %722 = vmatpush1.msra.mxu0 0.0
          %723 = vmatprep.subr.mxu0 0.0
          %724 = vmatpush1.msra.mxu0 0.0
          %725 = vmatprep.subr.mxu0 0.0
          %726 = vmatpush1.msra.mxu0 0.0
          %727 = vmatprep.subr.mxu0 0.0
          %728 = vmatpush1.msra.mxu0 0.0
          %729 = vmatprep.subr.mxu0 0.0
          %730 = vmatpush1.msra.mxu0 0.0
          %731 = vmatprep.subr.mxu0 0.0
          %732 = vmatpush1.msra.mxu0 0.0
          %733 = vmatprep.subr.mxu0 0.0
          %734 = vmatpush1.msra.mxu0 0.0
          %735 = vmatprep.subr.mxu0 0.0
          %736 = vmatpush1.msra.mxu0 0.0
          %737 = vmatprep.subr.mxu0 0.0
          %738 = vmatpush1.msra.mxu0 0.0
          %739 = vmatprep.subr.mxu0 0.0
          %740 = vmatpush1.msra.mxu0 0.0
          %741 = vmatprep.subr.mxu0 0.0
          %742 = vmatpush1.msra.mxu0 0.0
          %743 = vmatprep.subr.mxu0 0.0
          %744 = vmatpush1.msra.mxu0 0.0
          %745 = vmatprep.subr.mxu0 0.0
          %746 = vmatpush1.msra.mxu0 0.0
          %747 = vmatprep.subr.mxu0 0.0
          %748 = vmatpush1.msra.mxu0 0.0
          %749 = vmatprep.subr.mxu0 0.0
          %750 = vmatpush1.msra.mxu0 0.0
          %751 = vmatprep.subr.mxu0 0.0
          %752 = vmatpush1.msra.mxu0 0.0
          %753 = vmatprep.subr.mxu0 0.0
          %754 = vmatpush1.msra.mxu0 0.0
          %755 = vmatprep.subr.mxu0 0.0
          %756 = vmatpush1.msra.mxu0 0.0
          %757 = vmatprep.subr.mxu0 0.0
          %758 = vmatpush1.msra.mxu0 0.0
          %759 = vmatprep.subr.mxu0 0.0
          %760 = vmatpush1.msra.mxu0 0.0
          %761 = vmatprep.subr.mxu0 0.0
          %762 = vmatpush1.msra.mxu0 0.0
          %763 = vmatprep.subr.mxu0 0.0
          %764 = vmatpush1.msra.mxu0 0.0
          %765 = vmatprep.subr.mxu0 0.0
          %766 = vmatpush1.msra.mxu0 0.0
          %767 = vmatprep.subr.mxu0 0.0
          %768 = vmatpush1.msra.mxu0 0.0
          %769 = vmatprep.subr.mxu0 0.0
          %770 = vmatpush1.msra.mxu0 0.0
          %771 = vmatprep.subr.mxu0 0.0
          %772 = vmatpush1.msra.mxu0 0.0
          %773 = vmatprep.mubr.f32.mxu0 0.0
          %774 = vmatmul.mubr.f32.gmra.mrb[0].mxu0 %v707
          %v775 = vpop.f32.mrb[0].mxu0
          %v776 = vadd.f32 0.0, %v775
          %v777 = vpop.f32.mrb[0].mxu0
          %778 = vdwg.mxu0
          %v780 = vsel %vm705, %v703, 0
          %782 = vmatprep.subr.mxu0 0.0
          %783 = vmatpush1.msra.mxu0 %v704
          %784 = vmatprep.subr.mxu0 0.0
          %785 = vmatpush1.msra.mxu0 0.0
          %786 = vmatprep.subr.mxu0 0.0
          %787 = vmatpush1.msra.mxu0 0.0
          %788 = vmatprep.subr.mxu0 0.0
          %789 = vmatpush1.msra.mxu0 0.0
          %790 = vmatprep.subr.mxu0 0.0
          %791 = vmatpush1.msra.mxu0 0.0
          %792 = vmatprep.subr.mxu0 0.0
          %793 = vmatpush1.msra.mxu0 0.0
          %794 = vmatprep.subr.mxu0 0.0
          %795 = vmatpush1.msra.mxu0 0.0
          %796 = vmatprep.subr.mxu0 0.0
          %797 = vmatpush1.msra.mxu0 0.0
          %798 = vmatprep.subr.mxu0 0.0
          %799 = vmatpush1.msra.mxu0 0.0
          %800 = vmatprep.subr.mxu0 0.0
          %801 = vmatpush1.msra.mxu0 0.0
          %802 = vmatprep.subr.mxu0 0.0
          %803 = vmatpush1.msra.mxu0 0.0
          %804 = vmatprep.subr.mxu0 0.0
          %805 = vmatpush1.msra.mxu0 0.0
          %806 = vmatprep.subr.mxu0 0.0
          %807 = vmatpush1.msra.mxu0 0.0
          %808 = vmatprep.subr.mxu0 0.0
          %809 = vmatpush1.msra.mxu0 0.0
          %810 = vmatprep.subr.mxu0 0.0
          %811 = vmatpush1.msra.mxu0 0.0
          %812 = vmatprep.subr.mxu0 0.0
          %813 = vmatpush1.msra.mxu0 0.0
          %814 = vmatprep.subr.mxu0 0.0
          %815 = vmatpush1.msra.mxu0 0.0
          %816 = vmatprep.subr.mxu0 0.0
          %817 = vmatpush1.msra.mxu0 0.0
          %818 = vmatprep.subr.mxu0 0.0
          %819 = vmatpush1.msra.mxu0 0.0
          %820 = vmatprep.subr.mxu0 0.0
          %821 = vmatpush1.msra.mxu0 0.0
          %822 = vmatprep.subr.mxu0 0.0
          %823 = vmatpush1.msra.mxu0 0.0
          %824 = vmatprep.subr.mxu0 0.0
          %825 = vmatpush1.msra.mxu0 0.0
          %826 = vmatprep.subr.mxu0 0.0
          %827 = vmatpush1.msra.mxu0 0.0
          %828 = vmatprep.subr.mxu0 0.0
          %829 = vmatpush1.msra.mxu0 0.0
          %830 = vmatprep.subr.mxu0 0.0
          %831 = vmatpush1.msra.mxu0 0.0
          %832 = vmatprep.subr.mxu0 0.0
          %833 = vmatpush1.msra.mxu0 0.0
          %834 = vmatprep.subr.mxu0 0.0
          %835 = vmatpush1.msra.mxu0 0.0
          %836 = vmatprep.subr.mxu0 0.0
          %837 = vmatpush1.msra.mxu0 0.0
          %838 = vmatprep.subr.mxu0 0.0
          %839 = vmatpush1.msra.mxu0 0.0
          %840 = vmatprep.subr.mxu0 0.0
          %841 = vmatpush1.msra.mxu0 0.0
          %842 = vmatprep.subr.mxu0 0.0
          %843 = vmatpush1.msra.mxu0 0.0
          %844 = vmatprep.subr.mxu0 0.0
          %845 = vmatpush1.msra.mxu0 0.0
          %846 = vmatprep.mubr.f32.mxu0 0.0
          %847 = vmatmul.mubr.f32.gmra.mrb[0].mxu0 %v780
          %v848 = vpop.f32.mrb[0].mxu0
          %v849 = vadd.f32 0.0, %v848
          %v850 = vpop.f32.mrb[0].mxu0
          %851 = vdwg.mxu0
          %v852 = vlaneseq
          %v853 = vshrl.u32 %v852, 7
          %v854 = vsub.s32 0, %v853
          %v855 = vrot.slane %v776, %v854
          %v856 = vmul.f32 %v511, %v855
          %v857 = vmul.f32 %v512, %v855
          %v858 = vmul.f32 %v513, %v855
          %v859 = vmul.f32 %v514, %v855
          %v860 = vlaneseq
          %v861 = vshrl.u32 %v860, 7
          %v862 = vsub.s32 0, %v861
          %v863 = vrot.slane %v849, %v862
          %v864 = vadd.f32 %v856, %v863
          %v865 = vadd.f32 %v857, %v863
          %v866 = vadd.f32 %v858, %v863
          %v867 = vadd.f32 %v859, %v863
          %v868 = vmax.f32 %v864, 0.0
          %v869 = vmax.f32 %v865, 0.0
          %v870 = vmax.f32 %v866, 0.0
          %v871 = vmax.f32 %v867, 0.0
          %872 = vst [vmem:[#allocation5] sm:$0xff] %v868
          %873 = vst [vmem:[#allocation5 + $0x8] sm:$0xff] %v869
          %874 = vst [vmem:[#allocation5 + $0x10] sm:$0xff] %v870
          %875 = vst [vmem:[#allocation5 + $0x18] sm:$0xff] %v871
        $region52: #{tpu_custom_call.1} parent=43 // pred_fallthru
          _
        // Predicated region
        $region53: #{tpu_custom_call.1} parent=43 // pred_check
          %p876 = pneg %p170
        $region54: #{tpu_custom_call.1} parent=43 // pred_check_branch
          %878 = sbr.rel (%p876) target = $region56
        $region55: #{tpu_custom_call.1} parent=43 // pred_region
          %s880 = ssub.s32 512, 512
          %881 = vsyncadd [#allocation4], %s880
          %s882 = sshll.u32 [#allocation5], 4
          %s883 = int_to_ptr.vmem [resolvable:$true] %s882
          %888 = dma.vmem_to_hbm [thread:$0]  %s883, 512, %s6, [#allocation4], 128, 128, 8
        $region56: #{tpu_custom_call.1} parent=43 // pred_fallthru
          _
        // Predicated region
        $region57: #{tpu_custom_call.1} parent=43 // pred_check
          %p889 = pneg %p170
        $region58: #{tpu_custom_call.1} parent=43 // pred_check_branch
          %891 = sbr.rel (%p889) target = $region60
        $region59: #{tpu_custom_call.1} parent=43 // pred_region
          %892 = dma.done [#allocation4], 512
        $region60: #{tpu_custom_call.1} parent=43 // pred_fallthru
          _
      $region44: #{tpu_custom_call.1} parent=5 // pred_fallthru
        _
      %p893 = scmp.le.s32.totalorder 2, %s14
      // Predicated region
      $region61: #{tpu_custom_call.1} parent=5 // pred_check
        %p894 = pneg %p893
      $region62: #{tpu_custom_call.1} parent=5 // pred_check_branch
        %896 = sbr.rel (%p894) target = $region64
      $region63: #{tpu_custom_call.1} parent=5 // pred_region
        %s897 = ssub.s32 %s14, 2
      $region64: #{tpu_custom_call.1} parent=5 // pred_fallthru
        _
    $region6: #{tpu_custom_call.1} parent=1 // loop_footer
      %s18 = sadd.s32 1, %s14
    $region7: #{tpu_custom_call.1} parent=1 // loop_footer_branch
      %13 = sbr.rel target = $region3
    $region8: #{tpu_custom_call.1} parent=1 // loop_exit
      _
    %898 = vsyncpa [#allocation3], 1
    %s899 = scalar_lea.sflag [#allocation3], 1
    %900 = vsyncpa %s899, 1
    %901 = vsyncpa [#allocation4], 1
    %s902 = scalar_lea.sflag [#allocation4], 1
    %903 = vsyncpa %s902, 1

</llo_original>
